<compile_context>
chip_gen: v7x
topology: tpu7x:2x2x1
jax: 0.10.0
libtpu: 0.0.40
codegen_flags: <defaults>
</compile_context>

<pallas_src>
import jax
import jax.numpy as jnp
from jax.experimental import pallas as pl
from jax.experimental.pallas import tpu as pltpu


# ---------------------------------------------------------------------------
# hidden-dim rule from ModelArgs / FeedForward.__init__
# ---------------------------------------------------------------------------
def ffn_hidden_dim(dim, multiple_of, ffn_dim_multiplier=None):
    hidden = 4 * dim
    hidden = int(2 * hidden / 3)
    if ffn_dim_multiplier is not None:
        hidden = int(ffn_dim_multiplier * hidden)
    return multiple_of * ((hidden + multiple_of - 1) // multiple_of)


def _round_up(x, m):
    return ((x + m - 1) // m) * m


def _choose_tile_h(H):
    for th in (512, 384, 256, 128):
        if H % th == 0:
            return th
    raise ValueError("hidden_dim must be a multiple of 128")


def _choose_tile_m(M):
    m8 = _round_up(M, 8)
    # Small / decode: a single row tile (mem-bound anyway).
    # Large M: 256-row tiles -> past the bf16 compute-bound crossover on
    # v5e/v7x, >=2 row tiles so the parallel axis shards both v7x TCs.
    return m8 if m8 <= 256 else 256


# ---------------------------------------------------------------------------
# weight preparation (done ONCE at init):
#   torch nn.Linear stores W as (out, in).
#   w1, w3: (H, D)  ->  fused slab  w13: (H//th, D, 2*th)   [.., :th]=w1, [.., th:]=w3
#   w2    : (D, H)  ->  slab        w2t: (H//th, th, D)
# Each grid step's weight tile is then a single contiguous HBM slab.
# ---------------------------------------------------------------------------
def prepare_ffn_weights(w1, w2, w3, *, tile_h=None, dtype=None):
    H, D = w1.shape
    assert w3.shape == (H, D) and w2.shape == (D, H)
    if tile_h is None:
        tile_h = _choose_tile_h(H)
    assert H % tile_h == 0 and tile_h % 128 == 0, "tile_h must be lane-dense and divide H"

    nH = H // tile_h
    w1_tiles = w1.T.reshape(D, nH, tile_h).transpose(1, 0, 2)   # (nH, D, th)
    w3_tiles = w3.T.reshape(D, nH, tile_h).transpose(1, 0, 2)   # (nH, D, th)
    w13 = jnp.concatenate([w1_tiles, w3_tiles], axis=-1)        # (nH, D, 2*th)
    w2_tiles = w2.T.reshape(nH, tile_h, D)                      # (nH, th, D)

    if dtype is not None:
        w13 = w13.astype(dtype)
        w2_tiles = w2_tiles.astype(dtype)
    return {"w13": w13, "w2": w2_tiles}


# ---------------------------------------------------------------------------
# fused SwiGLU kernel
#   grid = (Mp // tile_m, H // tile_h)
#   axis 0: independent row tiles ("parallel", megacore-shardable)
#   axis 1: hidden-dim reduction ("arbitrary", f32 VMEM accumulator)
# ---------------------------------------------------------------------------
def _swiglu_kernel(x_ref, w13_ref, w2_ref, o_ref, acc_ref):
    j = pl.program_id(1)

    @pl.when(j == 0)
    def _():
        acc_ref[...] = jnp.zeros_like(acc_ref)

    th = w2_ref.shape[0]                                      # tile_h (static)
    x = x_ref[...]                                            # (tm, D)

    # ONE fused gate matmul: (tm, D) x (D, 2*th) -> (tm, 2*th), f32 accumulate.
    h13 = jnp.dot(x, w13_ref[...], preferred_element_type=jnp.float32)
    h1 = h13[:, :th]                                          # lane-aligned split
    h3 = h13[:, th:]

    # SiLU + gating in f32 (v5e has no bf16 VPU/EUP path).
    g = (h1 * jax.nn.sigmoid(h1)) * h3

    # Down-projection partial sum for this hidden tile.
    # NOTE: in bf16 mode g is rounded to bf16 per hidden tile before the dot;
    # accumulation itself stays f32.
    acc_ref[...] += jnp.dot(g.astype(w2_ref.dtype), w2_ref[...],
                            preferred_element_type=jnp.float32)   # (tm, D)

    @pl.when(j == pl.num_programs(1) - 1)
    def _():
        o_ref[...] = acc_ref[...].astype(o_ref.dtype)


def feed_forward(x, w13_tiles, w2_tiles, *, tile_m=None, vmem_limit_bytes=None):
    """SwiGLU FFN.

    x:         (..., D)
    w13_tiles: (H//tile_h, D, 2*tile_h)  pre-tiled fused w1/w3 (see prepare_ffn_weights)
    w2_tiles:  (H//tile_h, tile_h, D)
    """
    D = x.shape[-1]
    nH, Dw, two_th = w13_tiles.shape
    tile_h = two_th // 2
    H = nH * tile_h
    assert Dw == D and w2_tiles.shape == (nH, tile_h, D)
    assert D % 128 == 0, "dim must be a multiple of 128 lanes"
    assert tile_h % 128 == 0

    lead = x.shape[:-1]
    x2 = x.reshape(-1, D)
    M = x2.shape[0]

    if tile_m is None:
        tile_m = _choose_tile_m(M)
    assert tile_m % 8 == 0, "row tile must be a multiple of 8 sublanes"

    # Pad rows to a multiple of tile_m (cheap, sliced off afterwards).
    Mp = _round_up(M, tile_m)
    if Mp != M:
        x2 = jnp.pad(x2, ((0, Mp - M), (0, 0)))

    grid = (Mp // tile_m, nH)

    # VMEM budget: double-buffered inputs/outputs + f32 accumulator (+ headroom).
    w_item = jnp.dtype(w13_tiles.dtype).itemsize
    x_item = jnp.dtype(x.dtype).itemsize
    need = (2 * (D * 2 * tile_h * w_item          # fused gate weight tile
                 + tile_h * D * w_item            # down-proj weight tile
                 + tile_m * D * x_item            # x tile
                 + tile_m * D * x_item)           # out tile
            + tile_m * D * 4)                     # f32 accumulator
    if vmem_limit_bytes is None:
        vmem_limit_bytes = max(32 << 20, min(int(1.3 * need) + (2 << 20), 128 << 20))

    # Advisory cost for XLA's scheduler: 2 matmuls (gate 2H + down-proj H),
    # weights re-streamed once per row tile.
    row_tiles = Mp // tile_m
    cost = pl.CostEstimate(
        flops=6 * Mp * D * H + 4 * Mp * H,
        transcendentals=Mp * H,
        bytes_accessed=int(2 * Mp * D * x_item
                           + row_tiles * (w13_tiles.size + w2_tiles.size) * w_item),
    )

    out = pl.pallas_call(
        _swiglu_kernel,
        out_shape=jax.ShapeDtypeStruct((Mp, D), x.dtype),
        grid_spec=pltpu.PrefetchScalarGridSpec(
            num_scalar_prefetch=0,
            grid=grid,
            in_specs=[
                pl.BlockSpec((tile_m, D), lambda i, j: (i, 0)),            # x (resident over j)
                pl.BlockSpec((None, D, 2 * tile_h), lambda i, j: (j, 0, 0)),  # fused w1/w3 slab
                pl.BlockSpec((None, tile_h, D), lambda i, j: (j, 0, 0)),      # w2 slab
            ],
            out_specs=pl.BlockSpec((tile_m, D), lambda i, j: (i, 0)),
            scratch_shapes=[pltpu.VMEM((tile_m, D), jnp.float32)],         # f32 accumulator
        ),
        compiler_params=pltpu.CompilerParams(
            dimension_semantics=("parallel", "arbitrary"),
            vmem_limit_bytes=vmem_limit_bytes),
        cost_estimate=cost,
    )(x2, w13_tiles, w2_tiles)

    return out[:M].reshape(*lead, D)


# ---------------------------------------------------------------------------
# pure-JAX reference (f32, highest precision), from torch-layout weights
# ---------------------------------------------------------------------------
def feed_forward_ref(x, w1, w2, w3):
    hi = jax.lax.Precision.HIGHEST
    xf = x.astype(jnp.float32)
    h1 = jnp.dot(xf, w1.astype(jnp.float32).T, precision=hi)
    h3 = jnp.dot(xf, w3.astype(jnp.float32).T, precision=hi)
    g = (h1 * jax.nn.sigmoid(h1)) * h3
    return jnp.dot(g, w2.astype(jnp.float32).T, precision=hi)


if __name__ == "__main__":
    key = jax.random.PRNGKey(0)
    kx, k1, k2, k3 = jax.random.split(key, 4)

    # Small shapes consistent with the module (dim and hidden multiples of 128).
    DIM = 256
    MULTIPLE_OF = 128
    HIDDEN = ffn_hidden_dim(DIM, MULTIPLE_OF)       # 768
    BATCH, SEQ = 2, 8                               # 16 rows

    scale = 0.02
    w1 = scale * jax.random.normal(k1, (HIDDEN, DIM), jnp.float32)   # torch (out, in)
    w2 = scale * jax.random.normal(k2, (DIM, HIDDEN), jnp.float32)
    w3 = scale * jax.random.normal(k3, (HIDDEN, DIM), jnp.float32)
    x = jax.random.normal(kx, (BATCH, SEQ, DIM), jnp.float32)

    ref = feed_forward_ref(x, w1, w2, w3)

    # ---- f32 path --------------------------------------------------------
    wp = prepare_ffn_weights(w1, w2, w3, dtype=jnp.float32)
    fwd = jax.jit(lambda x, a, b: feed_forward(x, a, b))
    out = fwd(x, wp["w13"], wp["w2"])
    jax.block_until_ready(out)

    assert out.shape == (BATCH, SEQ, DIM)
    assert out.dtype == jnp.float32
    assert bool(jnp.all(jnp.isfinite(out)))
    max_err = float(jnp.max(jnp.abs(out - ref)))
    assert max_err < 5e-3, f"f32 mismatch vs reference: max abs err = {max_err}"

    # ---- bf16 weight/activation fast path (primary path on v5e) ----------
    wp_bf16 = prepare_ffn_weights(w1, w2, w3, dtype=jnp.bfloat16)
    out_bf16 = jax.jit(lambda x, a, b: feed_forward(x, a, b))(
        x.astype(jnp.bfloat16), wp_bf16["w13"], wp_bf16["w2"])
    jax.block_until_ready(out_bf16)
    assert out_bf16.dtype == jnp.bfloat16
    err_bf16 = float(jnp.max(jnp.abs(out_bf16.astype(jnp.float32) - ref)))
    assert err_bf16 < 5e-2, f"bf16 mismatch vs reference: max abs err = {err_bf16}"

    # ---- large-M path exercises the big-row-tile / multi-row-tile grid ----
    x_big = jax.random.normal(jax.random.PRNGKey(1), (4, 160, DIM), jnp.float32)  # 640 rows
    out_big = jax.jit(lambda x, a, b: feed_forward(x, a, b))(x_big, wp["w13"], wp["w2"])
    jax.block_until_ready(out_big)
    ref_big = feed_forward_ref(x_big, w1, w2, w3)
    err_big = float(jnp.max(jnp.abs(out_big - ref_big)))
    assert err_big < 5e-3, f"large-M mismatch vs reference: max abs err = {err_big}"

    print("KERNEL_OK")
</pallas_src>

<mosaic_0001>
module attributes {stable_mosaic.version = 11 : i64} {
  func.func @_swiglu_kernel(%arg0: i32, %arg1: i32, %arg2: memref<16x256xf32, #tpu.memory_space<vmem>>, %arg3: memref<1x256x768xf32, #tpu.memory_space<vmem>>, %arg4: memref<1x384x256xf32, #tpu.memory_space<vmem>>, %arg5: memref<16x256xf32, #tpu.memory_space<vmem>>, %arg6: memref<16x256xf32, #tpu.memory_space<vmem>>) attributes {dimension_semantics = [#tpu.dimension_semantics<parallel>, #tpu.dimension_semantics<arbitrary>], iteration_bounds = array<i64: 1, 2>, scalar_prefetch = 0 : i64, scratch_operands = 1 : i64, tpu.core_type = #tpu.core_type<tc>, window_params = [{transform_indices = @transform_0, window_bounds = array<i64: 16, 256>}, {transform_indices = @transform_1, window_bounds = array<i64: 1, 256, 768>}, {transform_indices = @transform_2, window_bounds = array<i64: 1, 384, 256>}, {transform_indices = @transform_3, window_bounds = array<i64: 16, 256>}]} {
    %c0_i32 = arith.constant 0 : i32
    %0 = arith.cmpi eq, %arg1, %c0_i32 : i32
    %1 = arith.extui %0 : i1 to i32
    %c0_i32_0 = arith.constant 0 : i32
    %2 = arith.cmpi ne, %1, %c0_i32_0 : i32
    scf.if %2 {
      %cst_15 = arith.constant 0.000000e+00 : f32
      %25 = vector.broadcast %cst_15 : f32 to vector<16x256xf32>
      %c0_16 = arith.constant 0 : index
      %c0_17 = arith.constant 0 : index
      %26 = vector.load %arg6[%c0_16, %c0_17] : memref<16x256xf32, #tpu.memory_space<vmem>>, vector<16x256xf32>
      tpu.vector_store %arg6[%c0_16, %c0_17], %25 {strides = array<i32>} : memref<16x256xf32, #tpu.memory_space<vmem>>, vector<16x256xf32>,
    } else {
    }
    %c0 = arith.constant 0 : index
    %c0_1 = arith.constant 0 : index
    %3 = vector.load %arg2[%c0, %c0_1] : memref<16x256xf32, #tpu.memory_space<vmem>>, vector<16x256xf32>
    %c0_2 = arith.constant 0 : index
    %c0_3 = arith.constant 0 : index
    %c0_4 = arith.constant 0 : index
    %4 = vector.load %arg3[%c0_2, %c0_3, %c0_4] : memref<1x256x768xf32, #tpu.memory_space<vmem>>, vector<1x256x768xf32>
    %5 = vector.shape_cast %4 : vector<1x256x768xf32> to vector<256x768xf32>
    %cst = arith.constant dense<0.000000e+00> : vector<16x768xf32>
    %6 = tpu.matmul %3, %5, %cst {dimension_numbers = #tpu.dot_dimension_numbers<[1], [0], [0], [1], [0, 0, 1, 1], [], []>} : vector<16x256xf32>, vector<256x768xf32>, vector<16x768xf32> -> vector<16x768xf32>
    %7 = vector.extract_strided_slice %6 {offsets = [0, 0], sizes = [16, 384], strides = [1, 1]} : vector<16x768xf32> to vector<16x384xf32>
    %8 = vector.extract_strided_slice %6 {offsets = [0, 384], sizes = [16, 384], strides = [1, 1]} : vector<16x768xf32> to vector<16x384xf32>
    %9 = arith.negf %7 : vector<16x384xf32>
    %10 = math.exp %9 : vector<16x384xf32>
    %cst_5 = arith.constant 1.000000e+00 : f32
    %11 = vector.broadcast %cst_5 : f32 to vector<16x384xf32>
    %12 = arith.addf %11, %10 : vector<16x384xf32>
    %13 = arith.divf %11, %12 : vector<16x384xf32>
    %14 = arith.mulf %7, %13 : vector<16x384xf32>
    %15 = arith.mulf %14, %8 : vector<16x384xf32>
    %c0_6 = arith.constant 0 : index
    %c0_7 = arith.constant 0 : index
    %16 = vector.load %arg6[%c0_6, %c0_7] : memref<16x256xf32, #tpu.memory_space<vmem>>, vector<16x256xf32>
    %c0_8 = arith.constant 0 : index
    %c0_9 = arith.constant 0 : index
    %c0_10 = arith.constant 0 : index
    %17 = vector.load %arg4[%c0_8, %c0_9, %c0_10] : memref<1x384x256xf32, #tpu.memory_space<vmem>>, vector<1x384x256xf32>
    %18 = vector.shape_cast %17 : vector<1x384x256xf32> to vector<384x256xf32>
    %cst_11 = arith.constant dense<0.000000e+00> : vector<16x256xf32>
    %19 = tpu.matmul %15, %18, %cst_11 {dimension_numbers = #tpu.dot_dimension_numbers<[1], [0], [0], [1], [0, 0, 1, 1], [], []>} : vector<16x384xf32>, vector<384x256xf32>, vector<16x256xf32> -> vector<16x256xf32>
    %20 = arith.addf %16, %19 : vector<16x256xf32>
    %c0_12 = arith.constant 0 : index
    %c0_13 = arith.constant 0 : index
    %21 = vector.load %arg6[%c0_12, %c0_13] : memref<16x256xf32, #tpu.memory_space<vmem>>, vector<16x256xf32>
    tpu.vector_store %arg6[%c0_12, %c0_13], %20 {strides = array<i32>} : memref<16x256xf32, #tpu.memory_space<vmem>>, vector<16x256xf32>,
    %c1_i32 = arith.constant 1 : i32
    %22 = arith.cmpi eq, %arg1, %c1_i32 : i32
    %23 = arith.extui %22 : i1 to i32
    %c0_i32_14 = arith.constant 0 : i32
    %24 = arith.cmpi ne, %23, %c0_i32_14 : i32
    scf.if %24 {
      %c0_15 = arith.constant 0 : index
      %c0_16 = arith.constant 0 : index
      %25 = vector.load %arg6[%c0_15, %c0_16] : memref<16x256xf32, #tpu.memory_space<vmem>>, vector<16x256xf32>
      %c0_17 = arith.constant 0 : index
      %c0_18 = arith.constant 0 : index
      %26 = vector.load %arg5[%c0_17, %c0_18] : memref<16x256xf32, #tpu.memory_space<vmem>>, vector<16x256xf32>
      tpu.vector_store %arg5[%c0_17, %c0_18], %25 {strides = array<i32>} : memref<16x256xf32, #tpu.memory_space<vmem>>, vector<16x256xf32>,
    } else {
    }
    return
  }
  func.func @transform_0(%arg0: i32, %arg1: i32) -> (i32, i32) {
    %c0_i32 = arith.constant 0 : i32
    %c0_i32_0 = arith.constant 0 : i32
    return %arg0, %c0_i32 : i32, i32
  }
  func.func @transform_1(%arg0: i32, %arg1: i32) -> (i32, i32, i32) {
    %c0_i32 = arith.constant 0 : i32
    %c0_i32_0 = arith.constant 0 : i32
    %c0_i32_1 = arith.constant 0 : i32
    return %arg1, %c0_i32, %c0_i32_0 : i32, i32, i32
  }
  func.func @transform_2(%arg0: i32, %arg1: i32) -> (i32, i32, i32) {
    %c0_i32 = arith.constant 0 : i32
    %c0_i32_0 = arith.constant 0 : i32
    %c0_i32_1 = arith.constant 0 : i32
    return %arg1, %c0_i32, %c0_i32_0 : i32, i32, i32
  }
  func.func @transform_3(%arg0: i32, %arg1: i32) -> (i32, i32) {
    %c0_i32 = arith.constant 0 : i32
    %c0_i32_0 = arith.constant 0 : i32
    return %arg0, %c0_i32 : i32, i32
  }
}

</mosaic_0001>

<llo_original>
// kernel: _lambda_.1
$region0: #{_lambda_.1}
  #allocation0 [shape = 'u32[]', space=smem, size = 0x4, offset = 0x4, fixed_abs, tag = 'smem constant byte address 0x4 - core index']
  #allocation1 [shape = 'u32[144,128]{1,0:T(1,128)}', space=vmem, size = 0x12000, scoped, tag = 'internal scratch']
  #allocation2 [shape = 'f32[16,256]{1,0:T(8,128)}', space=vmem, size = 0x4000, scoped, tag = 'scratch operand']
  %s0 = inlined_call_operand.hbm [shape: f32[16,256], index: 0, kind: input, shape index: {}]
  %s1 = inlined_call_operand.hbm [shape: f32[2,256,768], index: 1, kind: input, shape index: {}]
  %s2 = inlined_call_operand.hbm [shape: f32[2,384,256], index: 2, kind: input, shape index: {}]
  %s3 = inlined_call_operand.hbm [shape: f32[16,256], index: 3, kind: output, shape index: {}]
  %s4 = sld [smem:[#allocation0]]
  $region65: #{_lambda_.1} parent=0
    _
  %s6 = ssub.s32 1, %s4
  %s7 = scalar_select 0, %s6, %s4
  $region1: #{_lambda_.1} parent=0
    #allocation3 [shape = 'u8[16384]{0}', space=vmem, size = 0x4000, scoped, tag = 'input window, operand 0, single buffered']
    #allocation4 [shape = 's32[2]{0}', space=sflag, size = 0x8, scoped, tag = 'scoped memory for _lambda_.1']
    #allocation5 [shape = 's32[2]{0}', space=sflag, size = 0x8, scoped, tag = 'scoped memory for _lambda_.1']
    #allocation6 [shape = 'u8[1572864]{0}', space=vmem, size = 0x180000, scoped, tag = 'input window, operand 1']
    #allocation7 [shape = 's32[2]{0}', space=sflag, size = 0x8, scoped, tag = 'scoped memory for _lambda_.1']
    #allocation8 [shape = 'u8[786432]{0}', space=vmem, size = 0xc0000, scoped, tag = 'input window, operand 2']
    #allocation9 [shape = 'u8[16384]{0}', space=vmem, size = 0x4000, scoped, tag = 'output window, operand 0, single buffered']
    %8 = vsyncpa [#allocation4], 0
    %9 = vsyncpa [#allocation7], 0
    %s10 = scalar_lea.sflag [#allocation7], 1
    %11 = vsyncpa %s10, 0
    %12 = vsyncpa [#allocation5], 0
    loop: start=0, step=1, limit=4
    $region2: #{_lambda_.1} parent=1 // loop_pre_header
      _
    $region3: #{_lambda_.1} parent=1 // loop_header
      %s14 = sphi 0, %s18
      %p15 = scmp.ge.s32.totalorder %s14, 4
      %s21 = sphi 0, %s33
      %s22 = sphi 0, %s29
      %s23 = sphi 0, %s21
      %s24 = sphi 0, %s22
      %s25 = sphi 0, %s23
      %s26 = sphi 0, %s24
      %s36 = sphi 0, %s38
      %s39 = sphi 0, %s36
      %s40 = sphi 0, %s39
      %s56 = sphi 0, %s40
      %s62 = sphi 0, %s64
      %s65 = sphi 0, %s62
      %s66 = sphi 0, %s65
      %s82 = sphi 0, %s66
      %s88 = sphi 0, %s90
      %s91 = sphi 0, %s88
      %s92 = sphi 0, %s91
      %s108 = sphi 0, %s92
      %s114 = sphi 0, %s116
      %s117 = sphi 0, %s114
      %s118 = sphi 0, %s117
      %s134 = sphi 0, %s118
    $region4: #{_lambda_.1} parent=1 // loop_header_branch
      %17 = sbr.rel (%p15) target = $region8
    $region5: #{_lambda_.1} parent=1 // loop_body
      %s19 = ssub.s32 %s14, 1
      %s20 = ssub.s32 %s14, 2
      %s27 = sadd.s32 1, %s22
      %p28 = scmp.ge.s32.totalorder %s27, 2
      %s29 = scalar_select %p28, 0, %s27
      %s30 = sadd.s32 1, %s21
      %s31 = scalar_select %p28, %s30, %s21
      %p32 = scmp.ge.s32.totalorder %s31, 1
      %s33 = scalar_select %p32, 0, %s31
      %s34 = ssub.s32 %s21, %s33
      %p35 = scmp.eq.s32.totalorder %s34, 0
      %s37 = sadd.s32 %s36, 1
      %s38 = scalar_select %p35, %s36, %s37
      %p41 = pneg %p35
      %p42 = scmp.eq.s32.totalorder %s14, 1
      %p43 = por %p41, %p42
      %p44 = scmp.ne.s32.totalorder %s36, %s39
      %p45 = scmp.eq.s32.totalorder %s14, 0
      %p46 = por %p44, %p45
      %p47 = scmp.ne.s32.totalorder %s36, %s39
      %p48 = scmp.eq.s32.totalorder %s19, 1
      %p49 = por %p47, %p48
      %p50 = scmp.ne.s32.totalorder %s39, %s40
      %p51 = scmp.eq.s32.totalorder %s19, 0
      %p52 = por %p50, %p51
      %p53 = scmp.ne.s32.totalorder %s39, %s40
      %p54 = scmp.eq.s32.totalorder %s20, 1
      %p55 = por %p53, %p54
      %p57 = scmp.ne.s32.totalorder %s40, %s56
      %p58 = scmp.eq.s32.totalorder %s20, 0
      %p59 = por %p57, %p58
      %s60 = ssub.s32 %s22, %s29
      %p61 = scmp.eq.s32.totalorder %s60, 0
      %s63 = sadd.s32 %s62, 1
      %s64 = scalar_select %p61, %s62, %s63
      %p67 = pneg %p61
      %p68 = scmp.eq.s32.totalorder %s14, 1
      %p69 = por %p67, %p68
      %p70 = scmp.ne.s32.totalorder %s62, %s65
      %p71 = scmp.eq.s32.totalorder %s14, 0
      %p72 = por %p70, %p71
      %p73 = scmp.ne.s32.totalorder %s62, %s65
      %p74 = scmp.eq.s32.totalorder %s19, 1
      %p75 = por %p73, %p74
      %p76 = scmp.ne.s32.totalorder %s65, %s66
      %p77 = scmp.eq.s32.totalorder %s19, 0
      %p78 = por %p76, %p77
      %p79 = scmp.ne.s32.totalorder %s65, %s66
      %p80 = scmp.eq.s32.totalorder %s20, 1
      %p81 = por %p79, %p80
      %p83 = scmp.ne.s32.totalorder %s66, %s82
      %p84 = scmp.eq.s32.totalorder %s20, 0
      %p85 = por %p83, %p84
      %s86 = ssub.s32 %s22, %s29
      %p87 = scmp.eq.s32.totalorder %s86, 0
      %s89 = sadd.s32 %s88, 1
      %s90 = scalar_select %p87, %s88, %s89
      %p93 = pneg %p87
      %p94 = scmp.eq.s32.totalorder %s14, 1
      %p95 = por %p93, %p94
      %p96 = scmp.ne.s32.totalorder %s88, %s91
      %p97 = scmp.eq.s32.totalorder %s14, 0
      %p98 = por %p96, %p97
      %p99 = scmp.ne.s32.totalorder %s88, %s91
      %p100 = scmp.eq.s32.totalorder %s19, 1
      %p101 = por %p99, %p100
      %p102 = scmp.ne.s32.totalorder %s91, %s92
      %p103 = scmp.eq.s32.totalorder %s19, 0
      %p104 = por %p102, %p103
      %p105 = scmp.ne.s32.totalorder %s91, %s92
      %p106 = scmp.eq.s32.totalorder %s20, 1
      %p107 = por %p105, %p106
      %p109 = scmp.ne.s32.totalorder %s92, %s108
      %p110 = scmp.eq.s32.totalorder %s20, 0
      %p111 = por %p109, %p110
      %s112 = ssub.s32 %s21, %s33
      %p113 = scmp.eq.s32.totalorder %s112, 0
      %s115 = sadd.s32 %s114, 1
      %s116 = scalar_select %p113, %s114, %s115
      %p119 = pneg %p113
      %p120 = scmp.eq.s32.totalorder %s14, 1
      %p121 = por %p119, %p120
      %p122 = scmp.ne.s32.totalorder %s114, %s117
      %p123 = scmp.eq.s32.totalorder %s14, 0
      %p124 = por %p122, %p123
      %p125 = scmp.ne.s32.totalorder %s114, %s117
      %p126 = scmp.eq.s32.totalorder %s19, 1
      %p127 = por %p125, %p126
      %p128 = scmp.ne.s32.totalorder %s117, %s118
      %p129 = scmp.eq.s32.totalorder %s19, 0
      %p130 = por %p128, %p129
      %p131 = scmp.ne.s32.totalorder %s117, %s118
      %p132 = scmp.eq.s32.totalorder %s20, 1
      %p133 = por %p131, %p132
      %p135 = scmp.ne.s32.totalorder %s118, %s134
      %p136 = scmp.eq.s32.totalorder %s20, 0
      %p137 = por %p135, %p136
      %p138 = scmp.le.s32.totalorder 1, %s14
      %p139 = scmp.lt.s32.totalorder %s14, 3
      %p140 = pnand %p138, %p139
      %p141 = pneg %p140
      // Predicated region
      $region9: #{_lambda_.1} parent=5 // pred_check
        _
      $region10: #{_lambda_.1} parent=5 // pred_check_branch
        %143 = sbr.rel (%p140) target = $region12
      $region11: #{_lambda_.1} parent=5 // pred_region
        %s144 = ssub.s32 %s14, 1
        // Predicated region
        $region13: #{_lambda_.1} parent=11 // pred_check
          %p145 = pneg %p52
        $region14: #{_lambda_.1} parent=11 // pred_check_branch
          %147 = sbr.rel (%p145) target = $region16
        $region15: #{_lambda_.1} parent=11 // pred_region
          %s148 = smul.u32 2, %s23
          %s150 = ssub.s32 512, 512
          %151 = vsyncadd [#allocation4], %s150
          %s152 = smul.addr %s148, 2
          %s153 = smul.addr %s152, 128
          %s154 = scalar_lea.hbm %s0, %s153
          %s155 = sshll.u32 [#allocation3], 4
          %s156 = int_to_ptr.vmem [resolvable:$true] %s155
          %161 = dma.hbm_to_vmem [thread:$0]  %s154, 512, %s156, [#allocation4], 256, 256, 16
        $region16: #{_lambda_.1} parent=11 // pred_fallthru
          _
      $region12: #{_lambda_.1} parent=5 // pred_fallthru
        _
      %p162 = scmp.lt.s32.totalorder %s14, 2
      // Predicated region
      $region17: #{_lambda_.1} parent=5 // pred_check
        %p163 = pneg %p162
      $region18: #{_lambda_.1} parent=5 // pred_check_branch
        %165 = sbr.rel (%p163) target = $region20
      $region19: #{_lambda_.1} parent=5 // pred_region
        // Predicated region
        $region21: #{_lambda_.1} parent=19 // pred_check
          %p166 = pneg %p72
        $region22: #{_lambda_.1} parent=19 // pred_check_branch
          %168 = sbr.rel (%p166) target = $region24
        $region23: #{_lambda_.1} parent=19 // pred_region
          %s169 = sand.u32 %s14, 1
          %s170 = scalar_lea.sflag [#allocation7], %s169
          %s171 = sand.u32 %s62, 1
          %s172 = smul.addr %s171, 1536
          %s173 = scalar_lea.vmem [#allocation6], %s172
          %s175 = ssub.s32 24576, 24576
          %176 = vsyncadd %s170, %s175
          %s177 = smul.addr %s22, 192
          %s178 = smul.addr %s177, 128
          %s179 = scalar_lea.hbm %s1, %s178
          %s180 = sshll.u32 %s173, 4
          %s181 = int_to_ptr.vmem [resolvable:$true] %s180
          %186 = dma.hbm_to_vmem [thread:$0]  %s179, 24576, %s181, %s170, 768, 768, 48
        $region24: #{_lambda_.1} parent=19 // pred_fallthru
          _
        // Predicated region
        $region25: #{_lambda_.1} parent=19 // pred_check
          %p187 = pneg %p98
        $region26: #{_lambda_.1} parent=19 // pred_check_branch
          %189 = sbr.rel (%p187) target = $region28
        $region27: #{_lambda_.1} parent=19 // pred_region
          %s190 = sand.u32 %s14, 1
          %s191 = scalar_lea.sflag [#allocation7], %s190
          %s192 = sand.u32 %s88, 1
          %s193 = smul.addr %s192, 768
          %s194 = scalar_lea.vmem [#allocation8], %s193
          %s196 = ssub.s32 12288, 12288
          %197 = vsyncadd %s191, %s196
          %s198 = smul.addr %s22, 96
          %s199 = smul.addr %s198, 128
          %s200 = scalar_lea.hbm %s2, %s199
          %s201 = sshll.u32 %s194, 4
          %s202 = int_to_ptr.vmem [resolvable:$true] %s201
          %207 = dma.hbm_to_vmem [thread:$0]  %s200, 12288, %s202, %s191, 256, 256, 16
        $region28: #{_lambda_.1} parent=19 // pred_fallthru
          _
      $region20: #{_lambda_.1} parent=5 // pred_fallthru
        _
      %p208 = scmp.le.s32.totalorder 1, %s14
      %p209 = scmp.lt.s32.totalorder %s14, 3
      %p210 = pnand %p208, %p209
      %p211 = pneg %p210
      // Predicated region
      $region29: #{_lambda_.1} parent=5 // pred_check
        _
      $region30: #{_lambda_.1} parent=5 // pred_check_branch
        %213 = sbr.rel (%p210) target = $region32
      $region31: #{_lambda_.1} parent=5 // pred_region
        %s214 = ssub.s32 %s14, 1
        // Predicated region
        $region33: #{_lambda_.1} parent=31 // pred_check
          %p215 = pneg %p52
        $region34: #{_lambda_.1} parent=31 // pred_check_branch
          %217 = sbr.rel (%p215) target = $region36
        $region35: #{_lambda_.1} parent=31 // pred_region
          %218 = dma.done [#allocation4], 512
        $region36: #{_lambda_.1} parent=31 // pred_fallthru
          _
        %s219 = sand.u32 %s19, 1
        %s220 = scalar_lea.sflag [#allocation7], %s219
        %s221 = sand.u32 %s65, 1
        %s222 = smul.addr %s221, 1536
        %s223 = scalar_lea.vmem [#allocation6], %s222
        // Predicated region
        $region37: #{_lambda_.1} parent=31 // pred_check
          %p224 = pneg %p78
        $region38: #{_lambda_.1} parent=31 // pred_check_branch
          %226 = sbr.rel (%p224) target = $region40
        $region39: #{_lambda_.1} parent=31 // pred_region
          %227 = dma.done %s220, 24576
        $region40: #{_lambda_.1} parent=31 // pred_fallthru
          _
        %s228 = sand.u32 %s19, 1
        %s229 = scalar_lea.sflag [#allocation7], %s228
        %s230 = sand.u32 %s91, 1
        %s231 = smul.addr %s230, 768
        %s232 = scalar_lea.vmem [#allocation8], %s231
        // Predicated region
        $region41: #{_lambda_.1} parent=31 // pred_check
          %p233 = pneg %p104
        $region42: #{_lambda_.1} parent=31 // pred_check_branch
          %235 = sbr.rel (%p233) target = $region44
        $region43: #{_lambda_.1} parent=31 // pred_region
          %236 = dma.done %s229, 12288
        $region44: #{_lambda_.1} parent=31 // pred_fallthru
          _
        %p237 = pneg %p52
        %p238 = pneg %p49
        %s239 = sand.u32 %s19, 1
        %s240 = scalar_lea.sflag [#allocation7], %s239
        %s241 = sand.u32 %s65, 1
        %s242 = smul.addr %s241, 1536
        %s243 = scalar_lea.vmem [#allocation6], %s242
        %p244 = pneg %p78
        %p245 = pneg %p75
        %s246 = sand.u32 %s19, 1
        %s247 = scalar_lea.sflag [#allocation7], %s246
        %s248 = sand.u32 %s91, 1
        %s249 = smul.addr %s248, 768
        %s250 = scalar_lea.vmem [#allocation8], %s249
        %p251 = pneg %p104
        %p252 = pneg %p101
        %p253 = pneg %p130
        %p254 = pneg %p127
        %s255 = smul.u32 2, %s23
        %s256 = smul.u32 2, %s23
        %p257 = scmp.eq.s32.totalorder %s24, 0
        // Predicated region
        $region45: #{_lambda_.1} parent=31 // pred_check
          %p258 = pneg %p257
        $region46: #{_lambda_.1} parent=31 // pred_check_branch
          %260 = sbr.rel (%p258) target = $region48
        $region47: #{_lambda_.1} parent=31 // pred_region
          %261 = vst [vmem:[#allocation2] sm:$0xff] 0.0
          %262 = vst [vmem:[#allocation2 + $0x8] sm:$0xff] 0.0
          %263 = vst [vmem:[#allocation2 + $0x10] sm:$0xff] 0.0
          %264 = vst [vmem:[#allocation2 + $0x18] sm:$0xff] 0.0
        $region48: #{_lambda_.1} parent=31 // pred_fallthru
          _
        %v265 = vld [vmem:[#allocation3] sm:$0xff]
        %v266 = vld [vmem:[#allocation3 + $0x8] sm:$0xff]
        %v267 = vld [vmem:[#allocation3 + $0x10] sm:$0xff]
        %v268 = vld [vmem:[#allocation3 + $0x18] sm:$0xff]
        %v269 = vld [vmem:[%s223] sm:$0xff]
        %v270 = vld [vmem:[%s223 + $0x8] sm:$0xff]
        %v271 = vld [vmem:[%s223 + $0x10] sm:$0xff]
        %v272 = vld [vmem:[%s223 + $0x18] sm:$0xff]
        %v273 = vld [vmem:[%s223 + $0x20] sm:$0xff]
        %v274 = vld [vmem:[%s223 + $0x28] sm:$0xff]
        %v275 = vld [vmem:[%s223 + $0x30] sm:$0xff]
        %v276 = vld [vmem:[%s223 + $0x38] sm:$0xff]
        %v277 = vld [vmem:[%s223 + $0x40] sm:$0xff]
        %v278 = vld [vmem:[%s223 + $0x48] sm:$0xff]
        %v279 = vld [vmem:[%s223 + $0x50] sm:$0xff]
        %v280 = vld [vmem:[%s223 + $0x58] sm:$0xff]
        %v281 = vld [vmem:[%s223 + $0x60] sm:$0xff]
        %v282 = vld [vmem:[%s223 + $0x68] sm:$0xff]
        %v283 = vld [vmem:[%s223 + $0x70] sm:$0xff]
        %v284 = vld [vmem:[%s223 + $0x78] sm:$0xff]
        %v285 = vld [vmem:[%s223 + $0x80] sm:$0xff]
        %v286 = vld [vmem:[%s223 + $0x88] sm:$0xff]
        %v287 = vld [vmem:[%s223 + $0x90] sm:$0xff]
        %v288 = vld [vmem:[%s223 + $0x98] sm:$0xff]
        %v289 = vld [vmem:[%s223 + $0xa0] sm:$0xff]
        %v290 = vld [vmem:[%s223 + $0xa8] sm:$0xff]
        %v291 = vld [vmem:[%s223 + $0xb0] sm:$0xff]
        %v292 = vld [vmem:[%s223 + $0xb8] sm:$0xff]
        %v293 = vld [vmem:[%s223 + $0xc0] sm:$0xff]
        %v294 = vld [vmem:[%s223 + $0xc8] sm:$0xff]
        %v295 = vld [vmem:[%s223 + $0xd0] sm:$0xff]
        %v296 = vld [vmem:[%s223 + $0xd8] sm:$0xff]
        %v297 = vld [vmem:[%s223 + $0xe0] sm:$0xff]
        %v298 = vld [vmem:[%s223 + $0xe8] sm:$0xff]
        %v299 = vld [vmem:[%s223 + $0xf0] sm:$0xff]
        %v300 = vld [vmem:[%s223 + $0xf8] sm:$0xff]
        %v301 = vld [vmem:[%s223 + $0x100] sm:$0xff]
        %v302 = vld [vmem:[%s223 + $0x108] sm:$0xff]
        %v303 = vld [vmem:[%s223 + $0x110] sm:$0xff]
        %v304 = vld [vmem:[%s223 + $0x118] sm:$0xff]
        %v305 = vld [vmem:[%s223 + $0x120] sm:$0xff]
        %v306 = vld [vmem:[%s223 + $0x128] sm:$0xff]
        %v307 = vld [vmem:[%s223 + $0x130] sm:$0xff]
        %v308 = vld [vmem:[%s223 + $0x138] sm:$0xff]
        %v309 = vld [vmem:[%s223 + $0x140] sm:$0xff]
        %v310 = vld [vmem:[%s223 + $0x148] sm:$0xff]
        %v311 = vld [vmem:[%s223 + $0x150] sm:$0xff]
        %v312 = vld [vmem:[%s223 + $0x158] sm:$0xff]
        %v313 = vld [vmem:[%s223 + $0x160] sm:$0xff]
        %v314 = vld [vmem:[%s223 + $0x168] sm:$0xff]
        %v315 = vld [vmem:[%s223 + $0x170] sm:$0xff]
        %v316 = vld [vmem:[%s223 + $0x178] sm:$0xff]
        %v317 = vld [vmem:[%s223 + $0x180] sm:$0xff]
        %v318 = vld [vmem:[%s223 + $0x188] sm:$0xff]
        %v319 = vld [vmem:[%s223 + $0x190] sm:$0xff]
        %v320 = vld [vmem:[%s223 + $0x198] sm:$0xff]
        %v321 = vld [vmem:[%s223 + $0x1a0] sm:$0xff]
        %v322 = vld [vmem:[%s223 + $0x1a8] sm:$0xff]
        %v323 = vld [vmem:[%s223 + $0x1b0] sm:$0xff]
        %v324 = vld [vmem:[%s223 + $0x1b8] sm:$0xff]
        %v325 = vld [vmem:[%s223 + $0x1c0] sm:$0xff]
        %v326 = vld [vmem:[%s223 + $0x1c8] sm:$0xff]
        %v327 = vld [vmem:[%s223 + $0x1d0] sm:$0xff]
        %v328 = vld [vmem:[%s223 + $0x1d8] sm:$0xff]
        %v329 = vld [vmem:[%s223 + $0x1e0] sm:$0xff]
        %v330 = vld [vmem:[%s223 + $0x1e8] sm:$0xff]
        %v331 = vld [vmem:[%s223 + $0x1f0] sm:$0xff]
        %v332 = vld [vmem:[%s223 + $0x1f8] sm:$0xff]
        %v333 = vld [vmem:[%s223 + $0x200] sm:$0xff]
        %v334 = vld [vmem:[%s223 + $0x208] sm:$0xff]
        %v335 = vld [vmem:[%s223 + $0x210] sm:$0xff]
        %v336 = vld [vmem:[%s223 + $0x218] sm:$0xff]
        %v337 = vld [vmem:[%s223 + $0x220] sm:$0xff]
        %v338 = vld [vmem:[%s223 + $0x228] sm:$0xff]
        %v339 = vld [vmem:[%s223 + $0x230] sm:$0xff]
        %v340 = vld [vmem:[%s223 + $0x238] sm:$0xff]
        %v341 = vld [vmem:[%s223 + $0x240] sm:$0xff]
        %v342 = vld [vmem:[%s223 + $0x248] sm:$0xff]
        %v343 = vld [vmem:[%s223 + $0x250] sm:$0xff]
        %v344 = vld [vmem:[%s223 + $0x258] sm:$0xff]
        %v345 = vld [vmem:[%s223 + $0x260] sm:$0xff]
        %v346 = vld [vmem:[%s223 + $0x268] sm:$0xff]
        %v347 = vld [vmem:[%s223 + $0x270] sm:$0xff]
        %v348 = vld [vmem:[%s223 + $0x278] sm:$0xff]
        %v349 = vld [vmem:[%s223 + $0x280] sm:$0xff]
        %v350 = vld [vmem:[%s223 + $0x288] sm:$0xff]
        %v351 = vld [vmem:[%s223 + $0x290] sm:$0xff]
        %v352 = vld [vmem:[%s223 + $0x298] sm:$0xff]
        %v353 = vld [vmem:[%s223 + $0x2a0] sm:$0xff]
        %v354 = vld [vmem:[%s223 + $0x2a8] sm:$0xff]
        %v355 = vld [vmem:[%s223 + $0x2b0] sm:$0xff]
        %v356 = vld [vmem:[%s223 + $0x2b8] sm:$0xff]
        %v357 = vld [vmem:[%s223 + $0x2c0] sm:$0xff]
        %v358 = vld [vmem:[%s223 + $0x2c8] sm:$0xff]
        %v359 = vld [vmem:[%s223 + $0x2d0] sm:$0xff]
        %v360 = vld [vmem:[%s223 + $0x2d8] sm:$0xff]
        %v361 = vld [vmem:[%s223 + $0x2e0] sm:$0xff]
        %v362 = vld [vmem:[%s223 + $0x2e8] sm:$0xff]
        %v363 = vld [vmem:[%s223 + $0x2f0] sm:$0xff]
        %v364 = vld [vmem:[%s223 + $0x2f8] sm:$0xff]
        %v365 = vld [vmem:[%s223 + $0x300] sm:$0xff]
        %v366 = vld [vmem:[%s223 + $0x308] sm:$0xff]
        %v367 = vld [vmem:[%s223 + $0x310] sm:$0xff]
        %v368 = vld [vmem:[%s223 + $0x318] sm:$0xff]
        %v369 = vld [vmem:[%s223 + $0x320] sm:$0xff]
        %v370 = vld [vmem:[%s223 + $0x328] sm:$0xff]
        %v371 = vld [vmem:[%s223 + $0x330] sm:$0xff]
        %v372 = vld [vmem:[%s223 + $0x338] sm:$0xff]
        %v373 = vld [vmem:[%s223 + $0x340] sm:$0xff]
        %v374 = vld [vmem:[%s223 + $0x348] sm:$0xff]
        %v375 = vld [vmem:[%s223 + $0x350] sm:$0xff]
        %v376 = vld [vmem:[%s223 + $0x358] sm:$0xff]
        %v377 = vld [vmem:[%s223 + $0x360] sm:$0xff]
        %v378 = vld [vmem:[%s223 + $0x368] sm:$0xff]
        %v379 = vld [vmem:[%s223 + $0x370] sm:$0xff]
        %v380 = vld [vmem:[%s223 + $0x378] sm:$0xff]
        %v381 = vld [vmem:[%s223 + $0x380] sm:$0xff]
        %v382 = vld [vmem:[%s223 + $0x388] sm:$0xff]
        %v383 = vld [vmem:[%s223 + $0x390] sm:$0xff]
        %v384 = vld [vmem:[%s223 + $0x398] sm:$0xff]
        %v385 = vld [vmem:[%s223 + $0x3a0] sm:$0xff]
        %v386 = vld [vmem:[%s223 + $0x3a8] sm:$0xff]
        %v387 = vld [vmem:[%s223 + $0x3b0] sm:$0xff]
        %v388 = vld [vmem:[%s223 + $0x3b8] sm:$0xff]
        %v389 = vld [vmem:[%s223 + $0x3c0] sm:$0xff]
        %v390 = vld [vmem:[%s223 + $0x3c8] sm:$0xff]
        %v391 = vld [vmem:[%s223 + $0x3d0] sm:$0xff]
        %v392 = vld [vmem:[%s223 + $0x3d8] sm:$0xff]
        %v393 = vld [vmem:[%s223 + $0x3e0] sm:$0xff]
        %v394 = vld [vmem:[%s223 + $0x3e8] sm:$0xff]
        %v395 = vld [vmem:[%s223 + $0x3f0] sm:$0xff]
        %v396 = vld [vmem:[%s223 + $0x3f8] sm:$0xff]
        %v397 = vld [vmem:[%s223 + $0x400] sm:$0xff]
        %v398 = vld [vmem:[%s223 + $0x408] sm:$0xff]
        %v399 = vld [vmem:[%s223 + $0x410] sm:$0xff]
        %v400 = vld [vmem:[%s223 + $0x418] sm:$0xff]
        %v401 = vld [vmem:[%s223 + $0x420] sm:$0xff]
        %v402 = vld [vmem:[%s223 + $0x428] sm:$0xff]
        %v403 = vld [vmem:[%s223 + $0x430] sm:$0xff]
        %v404 = vld [vmem:[%s223 + $0x438] sm:$0xff]
        %v405 = vld [vmem:[%s223 + $0x440] sm:$0xff]
        %v406 = vld [vmem:[%s223 + $0x448] sm:$0xff]
        %v407 = vld [vmem:[%s223 + $0x450] sm:$0xff]
        %v408 = vld [vmem:[%s223 + $0x458] sm:$0xff]
        %v409 = vld [vmem:[%s223 + $0x460] sm:$0xff]
        %v410 = vld [vmem:[%s223 + $0x468] sm:$0xff]
        %v411 = vld [vmem:[%s223 + $0x470] sm:$0xff]
        %v412 = vld [vmem:[%s223 + $0x478] sm:$0xff]
        %v413 = vld [vmem:[%s223 + $0x480] sm:$0xff]
        %v414 = vld [vmem:[%s223 + $0x488] sm:$0xff]
        %v415 = vld [vmem:[%s223 + $0x490] sm:$0xff]
        %v416 = vld [vmem:[%s223 + $0x498] sm:$0xff]
        %v417 = vld [vmem:[%s223 + $0x4a0] sm:$0xff]
        %v418 = vld [vmem:[%s223 + $0x4a8] sm:$0xff]
        %v419 = vld [vmem:[%s223 + $0x4b0] sm:$0xff]
        %v420 = vld [vmem:[%s223 + $0x4b8] sm:$0xff]
        %v421 = vld [vmem:[%s223 + $0x4c0] sm:$0xff]
        %v422 = vld [vmem:[%s223 + $0x4c8] sm:$0xff]
        %v423 = vld [vmem:[%s223 + $0x4d0] sm:$0xff]
        %v424 = vld [vmem:[%s223 + $0x4d8] sm:$0xff]
        %v425 = vld [vmem:[%s223 + $0x4e0] sm:$0xff]
        %v426 = vld [vmem:[%s223 + $0x4e8] sm:$0xff]
        %v427 = vld [vmem:[%s223 + $0x4f0] sm:$0xff]
        %v428 = vld [vmem:[%s223 + $0x4f8] sm:$0xff]
        %v429 = vld [vmem:[%s223 + $0x500] sm:$0xff]
        %v430 = vld [vmem:[%s223 + $0x508] sm:$0xff]
        %v431 = vld [vmem:[%s223 + $0x510] sm:$0xff]
        %v432 = vld [vmem:[%s223 + $0x518] sm:$0xff]
        %v433 = vld [vmem:[%s223 + $0x520] sm:$0xff]
        %v434 = vld [vmem:[%s223 + $0x528] sm:$0xff]
        %v435 = vld [vmem:[%s223 + $0x530] sm:$0xff]
        %v436 = vld [vmem:[%s223 + $0x538] sm:$0xff]
        %v437 = vld [vmem:[%s223 + $0x540] sm:$0xff]
        %v438 = vld [vmem:[%s223 + $0x548] sm:$0xff]
        %v439 = vld [vmem:[%s223 + $0x550] sm:$0xff]
        %v440 = vld [vmem:[%s223 + $0x558] sm:$0xff]
        %v441 = vld [vmem:[%s223 + $0x560] sm:$0xff]
        %v442 = vld [vmem:[%s223 + $0x568] sm:$0xff]
        %v443 = vld [vmem:[%s223 + $0x570] sm:$0xff]
        %v444 = vld [vmem:[%s223 + $0x578] sm:$0xff]
        %v445 = vld [vmem:[%s223 + $0x580] sm:$0xff]
        %v446 = vld [vmem:[%s223 + $0x588] sm:$0xff]
        %v447 = vld [vmem:[%s223 + $0x590] sm:$0xff]
        %v448 = vld [vmem:[%s223 + $0x598] sm:$0xff]
        %v449 = vld [vmem:[%s223 + $0x5a0] sm:$0xff]
        %v450 = vld [vmem:[%s223 + $0x5a8] sm:$0xff]
        %v451 = vld [vmem:[%s223 + $0x5b0] sm:$0xff]
        %v452 = vld [vmem:[%s223 + $0x5b8] sm:$0xff]
        %v453 = vld [vmem:[%s223 + $0x5c0] sm:$0xff]
        %v454 = vld [vmem:[%s223 + $0x5c8] sm:$0xff]
        %v455 = vld [vmem:[%s223 + $0x5d0] sm:$0xff]
        %v456 = vld [vmem:[%s223 + $0x5d8] sm:$0xff]
        %v457 = vld [vmem:[%s223 + $0x5e0] sm:$0xff]
        %v458 = vld [vmem:[%s223 + $0x5e8] sm:$0xff]
        %v459 = vld [vmem:[%s223 + $0x5f0] sm:$0xff]
        %v460 = vld [vmem:[%s223 + $0x5f8] sm:$0xff]
        %461 = vmatprep.subr.mxu0 %v270
        %462 = vmatpush1.msra.mxu0 %v269
        %463 = vmatprep.subr.mxu0 %v276
        %464 = vmatpush1.msra.mxu0 %v275
        %465 = vmatprep.subr.mxu0 %v282
        %466 = vmatpush1.msra.mxu0 %v281
        %467 = vmatprep.subr.mxu0 %v288
        %468 = vmatpush1.msra.mxu0 %v287
        %469 = vmatprep.subr.mxu0 %v294
        %470 = vmatpush1.msra.mxu0 %v293
        %471 = vmatprep.subr.mxu0 %v300
        %472 = vmatpush1.msra.mxu0 %v299
        %473 = vmatprep.subr.mxu0 %v306
        %474 = vmatpush1.msra.mxu0 %v305
        %475 = vmatprep.subr.mxu0 %v312
        %476 = vmatpush1.msra.mxu0 %v311
        %477 = vmatprep.subr.mxu0 %v318
        %478 = vmatpush1.msra.mxu0 %v317
        %479 = vmatprep.subr.mxu0 %v324
        %480 = vmatpush1.msra.mxu0 %v323
        %481 = vmatprep.subr.mxu0 %v330
        %482 = vmatpush1.msra.mxu0 %v329
        %483 = vmatprep.subr.mxu0 %v336
        %484 = vmatpush1.msra.mxu0 %v335
        %485 = vmatprep.subr.mxu0 %v342
        %486 = vmatpush1.msra.mxu0 %v341
        %487 = vmatprep.subr.mxu0 %v348
        %488 = vmatpush1.msra.mxu0 %v347
        %489 = vmatprep.subr.mxu0 %v354
        %490 = vmatpush1.msra.mxu0 %v353
        %491 = vmatprep.subr.mxu0 %v360
        %492 = vmatpush1.msra.mxu0 %v359
        %493 = vmatprep.subr.mxu0 %v366
        %494 = vmatpush1.msra.mxu0 %v365
        %495 = vmatprep.subr.mxu0 %v372
        %496 = vmatpush1.msra.mxu0 %v371
        %497 = vmatprep.subr.mxu0 %v378
        %498 = vmatpush1.msra.mxu0 %v377
        %499 = vmatprep.subr.mxu0 %v384
        %500 = vmatpush1.msra.mxu0 %v383
        %501 = vmatprep.subr.mxu0 %v390
        %502 = vmatpush1.msra.mxu0 %v389
        %503 = vmatprep.subr.mxu0 %v396
        %504 = vmatpush1.msra.mxu0 %v395
        %505 = vmatprep.subr.mxu0 %v402
        %506 = vmatpush1.msra.mxu0 %v401
        %507 = vmatprep.subr.mxu0 %v408
        %508 = vmatpush1.msra.mxu0 %v407
        %509 = vmatprep.subr.mxu0 %v414
        %510 = vmatpush1.msra.mxu0 %v413
        %511 = vmatprep.subr.mxu0 %v420
        %512 = vmatpush1.msra.mxu0 %v419
        %513 = vmatprep.subr.mxu0 %v426
        %514 = vmatpush1.msra.mxu0 %v425
        %515 = vmatprep.subr.mxu0 %v432
        %516 = vmatpush1.msra.mxu0 %v431
        %517 = vmatprep.subr.mxu0 %v438
        %518 = vmatpush1.msra.mxu0 %v437
        %519 = vmatprep.subr.mxu0 %v444
        %520 = vmatpush1.msra.mxu0 %v443
        %521 = vmatprep.subr.mxu0 %v450
        %522 = vmatpush1.msra.mxu0 %v449
        %523 = vmatprep.subr.mxu0 %v456
        %524 = vmatpush1.msra.mxu0 %v455
        %525 = vmatprep.mubr.f32.mxu0 %v266
        %526 = vmatmul.mubr.f32.gmra.mrb[0].mxu0 %v265
        %v527 = vpop.f32.mrb[0].mxu0
        %v528 = vadd.f32 0.0, %v527
        %v529 = vpop.f32.mrb[0].mxu0
        %v530 = vadd.f32 0.0, %v529
        %531 = vmatprep.mubr.f32.mxu0 %v268
        %532 = vmatmul.mubr.f32.gmra.mrb[0].mxu0 %v267
        %v533 = vpop.f32.mrb[0].mxu0
        %v534 = vadd.f32 0.0, %v533
        %v535 = vpop.f32.mrb[0].mxu0
        %v536 = vadd.f32 0.0, %v535
        %537 = vdwg.mxu0
        %538 = vmatprep.subr.mxu0 %v272
        %539 = vmatpush1.msra.mxu0 %v271
        %540 = vmatprep.subr.mxu0 %v278
        %541 = vmatpush1.msra.mxu0 %v277
        %542 = vmatprep.subr.mxu0 %v284
        %543 = vmatpush1.msra.mxu0 %v283
        %544 = vmatprep.subr.mxu0 %v290
        %545 = vmatpush1.msra.mxu0 %v289
        %546 = vmatprep.subr.mxu0 %v296
        %547 = vmatpush1.msra.mxu0 %v295
        %548 = vmatprep.subr.mxu0 %v302
        %549 = vmatpush1.msra.mxu0 %v301
        %550 = vmatprep.subr.mxu0 %v308
        %551 = vmatpush1.msra.mxu0 %v307
        %552 = vmatprep.subr.mxu0 %v314
        %553 = vmatpush1.msra.mxu0 %v313
        %554 = vmatprep.subr.mxu0 %v320
        %555 = vmatpush1.msra.mxu0 %v319
        %556 = vmatprep.subr.mxu0 %v326
        %557 = vmatpush1.msra.mxu0 %v325
        %558 = vmatprep.subr.mxu0 %v332
        %559 = vmatpush1.msra.mxu0 %v331
        %560 = vmatprep.subr.mxu0 %v338
        %561 = vmatpush1.msra.mxu0 %v337
        %562 = vmatprep.subr.mxu0 %v344
        %563 = vmatpush1.msra.mxu0 %v343
        %564 = vmatprep.subr.mxu0 %v350
        %565 = vmatpush1.msra.mxu0 %v349
        %566 = vmatprep.subr.mxu0 %v356
        %567 = vmatpush1.msra.mxu0 %v355
        %568 = vmatprep.subr.mxu0 %v362
        %569 = vmatpush1.msra.mxu0 %v361
        %570 = vmatprep.subr.mxu0 %v368
        %571 = vmatpush1.msra.mxu0 %v367
        %572 = vmatprep.subr.mxu0 %v374
        %573 = vmatpush1.msra.mxu0 %v373
        %574 = vmatprep.subr.mxu0 %v380
        %575 = vmatpush1.msra.mxu0 %v379
        %576 = vmatprep.subr.mxu0 %v386
        %577 = vmatpush1.msra.mxu0 %v385
        %578 = vmatprep.subr.mxu0 %v392
        %579 = vmatpush1.msra.mxu0 %v391
        %580 = vmatprep.subr.mxu0 %v398
        %581 = vmatpush1.msra.mxu0 %v397
        %582 = vmatprep.subr.mxu0 %v404
        %583 = vmatpush1.msra.mxu0 %v403
        %584 = vmatprep.subr.mxu0 %v410
        %585 = vmatpush1.msra.mxu0 %v409
        %586 = vmatprep.subr.mxu0 %v416
        %587 = vmatpush1.msra.mxu0 %v415
        %588 = vmatprep.subr.mxu0 %v422
        %589 = vmatpush1.msra.mxu0 %v421
        %590 = vmatprep.subr.mxu0 %v428
        %591 = vmatpush1.msra.mxu0 %v427
        %592 = vmatprep.subr.mxu0 %v434
        %593 = vmatpush1.msra.mxu0 %v433
        %594 = vmatprep.subr.mxu0 %v440
        %595 = vmatpush1.msra.mxu0 %v439
        %596 = vmatprep.subr.mxu0 %v446
        %597 = vmatpush1.msra.mxu0 %v445
        %598 = vmatprep.subr.mxu0 %v452
        %599 = vmatpush1.msra.mxu0 %v451
        %600 = vmatprep.subr.mxu0 %v458
        %601 = vmatpush1.msra.mxu0 %v457
        %602 = vmatprep.mubr.f32.mxu0 %v266
        %603 = vmatmul.mubr.f32.gmra.mrb[0].mxu0 %v265
        %v604 = vpop.f32.mrb[0].mxu0
        %v605 = vadd.f32 0.0, %v604
        %v606 = vpop.f32.mrb[0].mxu0
        %v607 = vadd.f32 0.0, %v606
        %608 = vmatprep.mubr.f32.mxu0 %v268
        %609 = vmatmul.mubr.f32.gmra.mrb[0].mxu0 %v267
        %v610 = vpop.f32.mrb[0].mxu0
        %v611 = vadd.f32 0.0, %v610
        %v612 = vpop.f32.mrb[0].mxu0
        %v613 = vadd.f32 0.0, %v612
        %614 = vdwg.mxu0
        %615 = vmatprep.subr.mxu0 %v274
        %616 = vmatpush1.msra.mxu0 %v273
        %617 = vmatprep.subr.mxu0 %v280
        %618 = vmatpush1.msra.mxu0 %v279
        %619 = vmatprep.subr.mxu0 %v286
        %620 = vmatpush1.msra.mxu0 %v285
        %621 = vmatprep.subr.mxu0 %v292
        %622 = vmatpush1.msra.mxu0 %v291
        %623 = vmatprep.subr.mxu0 %v298
        %624 = vmatpush1.msra.mxu0 %v297
        %625 = vmatprep.subr.mxu0 %v304
        %626 = vmatpush1.msra.mxu0 %v303
        %627 = vmatprep.subr.mxu0 %v310
        %628 = vmatpush1.msra.mxu0 %v309
        %629 = vmatprep.subr.mxu0 %v316
        %630 = vmatpush1.msra.mxu0 %v315
        %631 = vmatprep.subr.mxu0 %v322
        %632 = vmatpush1.msra.mxu0 %v321
        %633 = vmatprep.subr.mxu0 %v328
        %634 = vmatpush1.msra.mxu0 %v327
        %635 = vmatprep.subr.mxu0 %v334
        %636 = vmatpush1.msra.mxu0 %v333
        %637 = vmatprep.subr.mxu0 %v340
        %638 = vmatpush1.msra.mxu0 %v339
        %639 = vmatprep.subr.mxu0 %v346
        %640 = vmatpush1.msra.mxu0 %v345
        %641 = vmatprep.subr.mxu0 %v352
        %642 = vmatpush1.msra.mxu0 %v351
        %643 = vmatprep.subr.mxu0 %v358
        %644 = vmatpush1.msra.mxu0 %v357
        %645 = vmatprep.subr.mxu0 %v364
        %646 = vmatpush1.msra.mxu0 %v363
        %647 = vmatprep.subr.mxu0 %v370
        %648 = vmatpush1.msra.mxu0 %v369
        %649 = vmatprep.subr.mxu0 %v376
        %650 = vmatpush1.msra.mxu0 %v375
        %651 = vmatprep.subr.mxu0 %v382
        %652 = vmatpush1.msra.mxu0 %v381
        %653 = vmatprep.subr.mxu0 %v388
        %654 = vmatpush1.msra.mxu0 %v387
        %655 = vmatprep.subr.mxu0 %v394
        %656 = vmatpush1.msra.mxu0 %v393
        %657 = vmatprep.subr.mxu0 %v400
        %658 = vmatpush1.msra.mxu0 %v399
        %659 = vmatprep.subr.mxu0 %v406
        %660 = vmatpush1.msra.mxu0 %v405
        %661 = vmatprep.subr.mxu0 %v412
        %662 = vmatpush1.msra.mxu0 %v411
        %663 = vmatprep.subr.mxu0 %v418
        %664 = vmatpush1.msra.mxu0 %v417
        %665 = vmatprep.subr.mxu0 %v424
        %666 = vmatpush1.msra.mxu0 %v423
        %667 = vmatprep.subr.mxu0 %v430
        %668 = vmatpush1.msra.mxu0 %v429
        %669 = vmatprep.subr.mxu0 %v436
        %670 = vmatpush1.msra.mxu0 %v435
        %671 = vmatprep.subr.mxu0 %v442
        %672 = vmatpush1.msra.mxu0 %v441
        %673 = vmatprep.subr.mxu0 %v448
        %674 = vmatpush1.msra.mxu0 %v447
        %675 = vmatprep.subr.mxu0 %v454
        %676 = vmatpush1.msra.mxu0 %v453
        %677 = vmatprep.subr.mxu0 %v460
        %678 = vmatpush1.msra.mxu0 %v459
        %679 = vmatprep.mubr.f32.mxu0 %v266
        %680 = vmatmul.mubr.f32.gmra.mrb[0].mxu0 %v265
        %v681 = vpop.f32.mrb[0].mxu0
        %v682 = vadd.f32 0.0, %v681
        %v683 = vpop.f32.mrb[0].mxu0
        %v684 = vadd.f32 0.0, %v683
        %685 = vmatprep.mubr.f32.mxu0 %v268
        %686 = vmatmul.mubr.f32.gmra.mrb[0].mxu0 %v267
        %v687 = vpop.f32.mrb[0].mxu0
        %v688 = vadd.f32 0.0, %v687
        %v689 = vpop.f32.mrb[0].mxu0
        %v690 = vadd.f32 0.0, %v689
        %691 = vdwg.mxu0
        %v692 = vxor.u32 %v528, 2147483648
        %v693 = vxor.u32 %v530, 2147483648
        %v694 = vxor.u32 %v605, 2147483648
        %v695 = vxor.u32 %v534, 2147483648
        %v696 = vxor.u32 %v536, 2147483648
        %v697 = vxor.u32 %v611, 2147483648
        %v698 = vmul.f32 %v692, 1.442695
        %v699 = vpow.pop %v698
        %v700 = vmul.f32 %v693, 1.442695
        %v701 = vpow.pop %v700
        %v702 = vmul.f32 %v694, 1.442695
        %v703 = vpow.pop %v702
        %v704 = vmul.f32 %v695, 1.442695
        %v705 = vpow.pop %v704
        %v706 = vmul.f32 %v696, 1.442695
        %v707 = vpow.pop %v706
        %v708 = vmul.f32 %v697, 1.442695
        %v709 = vpow.pop %v708
        %v710 = vadd.f32 %v699, 1.0
        %v711 = vadd.f32 %v701, 1.0
        %v712 = vadd.f32 %v703, 1.0
        %v713 = vadd.f32 %v705, 1.0
        %v714 = vadd.f32 %v707, 1.0
        %v715 = vadd.f32 %v709, 1.0
        %v716 = vrcp.pop %v710
        %v717 = vmul.f32 1.0, %v716
        %v718 = vrcp.pop %v711
        %v719 = vmul.f32 1.0, %v718
        %v720 = vrcp.pop %v712
        %v721 = vmul.f32 1.0, %v720
        %v722 = vrcp.pop %v713
        %v723 = vmul.f32 1.0, %v722
        %v724 = vrcp.pop %v714
        %v725 = vmul.f32 1.0, %v724
        %v726 = vrcp.pop %v715
        %v727 = vmul.f32 1.0, %v726
        %v728 = vmul.f32 %v528, %v717
        %v729 = vmul.f32 %v530, %v719
        %v730 = vmul.f32 %v605, %v721
        %v731 = vmul.f32 %v534, %v723
        %v732 = vmul.f32 %v536, %v725
        %v733 = vmul.f32 %v611, %v727
        %v734 = vmul.f32 %v728, %v607
        %v735 = vmul.f32 %v729, %v682
        %v736 = vmul.f32 %v730, %v684
        %v737 = vmul.f32 %v731, %v613
        %v738 = vmul.f32 %v732, %v688
        %v739 = vmul.f32 %v733, %v690
        %v740 = vld [vmem:[#allocation2] sm:$0xff]
        %v741 = vld [vmem:[#allocation2 + $0x8] sm:$0xff]
        %v742 = vld [vmem:[#allocation2 + $0x10] sm:$0xff]
        %v743 = vld [vmem:[#allocation2 + $0x18] sm:$0xff]
        %v744 = vld [vmem:[%s232] sm:$0xff]
        %v745 = vld [vmem:[%s232 + $0x8] sm:$0xff]
        %v746 = vld [vmem:[%s232 + $0x10] sm:$0xff]
        %v747 = vld [vmem:[%s232 + $0x18] sm:$0xff]
        %v748 = vld [vmem:[%s232 + $0x20] sm:$0xff]
        %v749 = vld [vmem:[%s232 + $0x28] sm:$0xff]
        %v750 = vld [vmem:[%s232 + $0x30] sm:$0xff]
        %v751 = vld [vmem:[%s232 + $0x38] sm:$0xff]
        %v752 = vld [vmem:[%s232 + $0x40] sm:$0xff]
        %v753 = vld [vmem:[%s232 + $0x48] sm:$0xff]
        %v754 = vld [vmem:[%s232 + $0x50] sm:$0xff]
        %v755 = vld [vmem:[%s232 + $0x58] sm:$0xff]
        %v756 = vld [vmem:[%s232 + $0x60] sm:$0xff]
        %v757 = vld [vmem:[%s232 + $0x68] sm:$0xff]
        %v758 = vld [vmem:[%s232 + $0x70] sm:$0xff]
        %v759 = vld [vmem:[%s232 + $0x78] sm:$0xff]
        %v760 = vld [vmem:[%s232 + $0x80] sm:$0xff]
        %v761 = vld [vmem:[%s232 + $0x88] sm:$0xff]
        %v762 = vld [vmem:[%s232 + $0x90] sm:$0xff]
        %v763 = vld [vmem:[%s232 + $0x98] sm:$0xff]
        %v764 = vld [vmem:[%s232 + $0xa0] sm:$0xff]
        %v765 = vld [vmem:[%s232 + $0xa8] sm:$0xff]
        %v766 = vld [vmem:[%s232 + $0xb0] sm:$0xff]
        %v767 = vld [vmem:[%s232 + $0xb8] sm:$0xff]
        %v768 = vld [vmem:[%s232 + $0xc0] sm:$0xff]
        %v769 = vld [vmem:[%s232 + $0xc8] sm:$0xff]
        %v770 = vld [vmem:[%s232 + $0xd0] sm:$0xff]
        %v771 = vld [vmem:[%s232 + $0xd8] sm:$0xff]
        %v772 = vld [vmem:[%s232 + $0xe0] sm:$0xff]
        %v773 = vld [vmem:[%s232 + $0xe8] sm:$0xff]
        %v774 = vld [vmem:[%s232 + $0xf0] sm:$0xff]
        %v775 = vld [vmem:[%s232 + $0xf8] sm:$0xff]
        %v776 = vld [vmem:[%s232 + $0x100] sm:$0xff]
        %v777 = vld [vmem:[%s232 + $0x108] sm:$0xff]
        %v778 = vld [vmem:[%s232 + $0x110] sm:$0xff]
        %v779 = vld [vmem:[%s232 + $0x118] sm:$0xff]
        %v780 = vld [vmem:[%s232 + $0x120] sm:$0xff]
        %v781 = vld [vmem:[%s232 + $0x128] sm:$0xff]
        %v782 = vld [vmem:[%s232 + $0x130] sm:$0xff]
        %v783 = vld [vmem:[%s232 + $0x138] sm:$0xff]
        %v784 = vld [vmem:[%s232 + $0x140] sm:$0xff]
        %v785 = vld [vmem:[%s232 + $0x148] sm:$0xff]
        %v786 = vld [vmem:[%s232 + $0x150] sm:$0xff]
        %v787 = vld [vmem:[%s232 + $0x158] sm:$0xff]
        %v788 = vld [vmem:[%s232 + $0x160] sm:$0xff]
        %v789 = vld [vmem:[%s232 + $0x168] sm:$0xff]
        %v790 = vld [vmem:[%s232 + $0x170] sm:$0xff]
        %v791 = vld [vmem:[%s232 + $0x178] sm:$0xff]
        %v792 = vld [vmem:[%s232 + $0x180] sm:$0xff]
        %v793 = vld [vmem:[%s232 + $0x188] sm:$0xff]
        %v794 = vld [vmem:[%s232 + $0x190] sm:$0xff]
        %v795 = vld [vmem:[%s232 + $0x198] sm:$0xff]
        %v796 = vld [vmem:[%s232 + $0x1a0] sm:$0xff]
        %v797 = vld [vmem:[%s232 + $0x1a8] sm:$0xff]
        %v798 = vld [vmem:[%s232 + $0x1b0] sm:$0xff]
        %v799 = vld [vmem:[%s232 + $0x1b8] sm:$0xff]
        %v800 = vld [vmem:[%s232 + $0x1c0] sm:$0xff]
        %v801 = vld [vmem:[%s232 + $0x1c8] sm:$0xff]
        %v802 = vld [vmem:[%s232 + $0x1d0] sm:$0xff]
        %v803 = vld [vmem:[%s232 + $0x1d8] sm:$0xff]
        %v804 = vld [vmem:[%s232 + $0x1e0] sm:$0xff]
        %v805 = vld [vmem:[%s232 + $0x1e8] sm:$0xff]
        %v806 = vld [vmem:[%s232 + $0x1f0] sm:$0xff]
        %v807 = vld [vmem:[%s232 + $0x1f8] sm:$0xff]
        %v808 = vld [vmem:[%s232 + $0x200] sm:$0xff]
        %v809 = vld [vmem:[%s232 + $0x208] sm:$0xff]
        %v810 = vld [vmem:[%s232 + $0x210] sm:$0xff]
        %v811 = vld [vmem:[%s232 + $0x218] sm:$0xff]
        %v812 = vld [vmem:[%s232 + $0x220] sm:$0xff]
        %v813 = vld [vmem:[%s232 + $0x228] sm:$0xff]
        %v814 = vld [vmem:[%s232 + $0x230] sm:$0xff]
        %v815 = vld [vmem:[%s232 + $0x238] sm:$0xff]
        %v816 = vld [vmem:[%s232 + $0x240] sm:$0xff]
        %v817 = vld [vmem:[%s232 + $0x248] sm:$0xff]
        %v818 = vld [vmem:[%s232 + $0x250] sm:$0xff]
        %v819 = vld [vmem:[%s232 + $0x258] sm:$0xff]
        %v820 = vld [vmem:[%s232 + $0x260] sm:$0xff]
        %v821 = vld [vmem:[%s232 + $0x268] sm:$0xff]
        %v822 = vld [vmem:[%s232 + $0x270] sm:$0xff]
        %v823 = vld [vmem:[%s232 + $0x278] sm:$0xff]
        %v824 = vld [vmem:[%s232 + $0x280] sm:$0xff]
        %v825 = vld [vmem:[%s232 + $0x288] sm:$0xff]
        %v826 = vld [vmem:[%s232 + $0x290] sm:$0xff]
        %v827 = vld [vmem:[%s232 + $0x298] sm:$0xff]
        %v828 = vld [vmem:[%s232 + $0x2a0] sm:$0xff]
        %v829 = vld [vmem:[%s232 + $0x2a8] sm:$0xff]
        %v830 = vld [vmem:[%s232 + $0x2b0] sm:$0xff]
        %v831 = vld [vmem:[%s232 + $0x2b8] sm:$0xff]
        %v832 = vld [vmem:[%s232 + $0x2c0] sm:$0xff]
        %v833 = vld [vmem:[%s232 + $0x2c8] sm:$0xff]
        %v834 = vld [vmem:[%s232 + $0x2d0] sm:$0xff]
        %v835 = vld [vmem:[%s232 + $0x2d8] sm:$0xff]
        %v836 = vld [vmem:[%s232 + $0x2e0] sm:$0xff]
        %v837 = vld [vmem:[%s232 + $0x2e8] sm:$0xff]
        %v838 = vld [vmem:[%s232 + $0x2f0] sm:$0xff]
        %v839 = vld [vmem:[%s232 + $0x2f8] sm:$0xff]
        %840 = vmatprep.subr.mxu0 %v745
        %841 = vmatpush1.msra.mxu0 %v744
        %842 = vmatprep.subr.mxu0 %v747
        %843 = vmatpush1.msra.mxu0 %v746
        %844 = vmatprep.subr.mxu0 %v749
        %845 = vmatpush1.msra.mxu0 %v748
        %846 = vmatprep.subr.mxu0 %v751
        %847 = vmatpush1.msra.mxu0 %v750
        %848 = vmatprep.subr.mxu0 %v753
        %849 = vmatpush1.msra.mxu0 %v752
        %850 = vmatprep.subr.mxu0 %v755
        %851 = vmatpush1.msra.mxu0 %v754
        %852 = vmatprep.subr.mxu0 %v757
        %853 = vmatpush1.msra.mxu0 %v756
        %854 = vmatprep.subr.mxu0 %v759
        %855 = vmatpush1.msra.mxu0 %v758
        %856 = vmatprep.subr.mxu0 %v761
        %857 = vmatpush1.msra.mxu0 %v760
        %858 = vmatprep.subr.mxu0 %v763
        %859 = vmatpush1.msra.mxu0 %v762
        %860 = vmatprep.subr.mxu0 %v765
        %861 = vmatpush1.msra.mxu0 %v764
        %862 = vmatprep.subr.mxu0 %v767
        %863 = vmatpush1.msra.mxu0 %v766
        %864 = vmatprep.subr.mxu0 %v769
        %865 = vmatpush1.msra.mxu0 %v768
        %866 = vmatprep.subr.mxu0 %v771
        %867 = vmatpush1.msra.mxu0 %v770
        %868 = vmatprep.subr.mxu0 %v773
        %869 = vmatpush1.msra.mxu0 %v772
        %870 = vmatprep.subr.mxu0 %v775
        %871 = vmatpush1.msra.mxu0 %v774
        %872 = vmatprep.subr.mxu0 %v777
        %873 = vmatpush1.msra.mxu0 %v776
        %874 = vmatprep.subr.mxu0 %v779
        %875 = vmatpush1.msra.mxu0 %v778
        %876 = vmatprep.subr.mxu0 %v781
        %877 = vmatpush1.msra.mxu0 %v780
        %878 = vmatprep.subr.mxu0 %v783
        %879 = vmatpush1.msra.mxu0 %v782
        %880 = vmatprep.subr.mxu0 %v785
        %881 = vmatpush1.msra.mxu0 %v784
        %882 = vmatprep.subr.mxu0 %v787
        %883 = vmatpush1.msra.mxu0 %v786
        %884 = vmatprep.subr.mxu0 %v789
        %885 = vmatpush1.msra.mxu0 %v788
        %886 = vmatprep.subr.mxu0 %v791
        %887 = vmatpush1.msra.mxu0 %v790
        %888 = vmatprep.subr.mxu0 %v793
        %889 = vmatpush1.msra.mxu0 %v792
        %890 = vmatprep.subr.mxu0 %v795
        %891 = vmatpush1.msra.mxu0 %v794
        %892 = vmatprep.subr.mxu0 %v797
        %893 = vmatpush1.msra.mxu0 %v796
        %894 = vmatprep.subr.mxu0 %v799
        %895 = vmatpush1.msra.mxu0 %v798
        %896 = vmatprep.subr.mxu0 %v801
        %897 = vmatpush1.msra.mxu0 %v800
        %898 = vmatprep.subr.mxu0 %v803
        %899 = vmatpush1.msra.mxu0 %v802
        %900 = vmatprep.subr.mxu0 %v805
        %901 = vmatpush1.msra.mxu0 %v804
        %902 = vmatprep.subr.mxu0 %v807
        %903 = vmatpush1.msra.mxu0 %v806
        %904 = vmatprep.mubr.f32.mxu0 %v735
        %905 = vmatmul.mubr.f32.gmra.mrb[0].mxu0 %v734
        %v906 = vpop.f32.mrb[0].mxu0
        %v907 = vadd.f32 0.0, %v906
        %v908 = vpop.f32.mrb[0].mxu0
        %v909 = vadd.f32 0.0, %v908
        %910 = vmatprep.mubr.f32.mxu0 %v738
        %911 = vmatmul.mubr.f32.gmra.mrb[0].mxu0 %v737
        %v912 = vpop.f32.mrb[0].mxu0
        %v913 = vadd.f32 0.0, %v912
        %v914 = vpop.f32.mrb[0].mxu0
        %v915 = vadd.f32 0.0, %v914
        %916 = vdwg.mxu0
        %917 = vmatprep.subr.mxu0 %v809
        %918 = vmatpush1.msra.mxu0 %v808
        %919 = vmatprep.subr.mxu0 %v811
        %920 = vmatpush1.msra.mxu0 %v810
        %921 = vmatprep.subr.mxu0 %v813
        %922 = vmatpush1.msra.mxu0 %v812
        %923 = vmatprep.subr.mxu0 %v815
        %924 = vmatpush1.msra.mxu0 %v814
        %925 = vmatprep.subr.mxu0 %v817
        %926 = vmatpush1.msra.mxu0 %v816
        %927 = vmatprep.subr.mxu0 %v819
        %928 = vmatpush1.msra.mxu0 %v818
        %929 = vmatprep.subr.mxu0 %v821
        %930 = vmatpush1.msra.mxu0 %v820
        %931 = vmatprep.subr.mxu0 %v823
        %932 = vmatpush1.msra.mxu0 %v822
        %933 = vmatprep.subr.mxu0 %v825
        %934 = vmatpush1.msra.mxu0 %v824
        %935 = vmatprep.subr.mxu0 %v827
        %936 = vmatpush1.msra.mxu0 %v826
        %937 = vmatprep.subr.mxu0 %v829
        %938 = vmatpush1.msra.mxu0 %v828
        %939 = vmatprep.subr.mxu0 %v831
        %940 = vmatpush1.msra.mxu0 %v830
        %941 = vmatprep.subr.mxu0 %v833
        %942 = vmatpush1.msra.mxu0 %v832
        %943 = vmatprep.subr.mxu0 %v835
        %944 = vmatpush1.msra.mxu0 %v834
        %945 = vmatprep.subr.mxu0 %v837
        %946 = vmatpush1.msra.mxu0 %v836
        %947 = vmatprep.subr.mxu0 %v839
        %948 = vmatpush1.msra.mxu0 %v838
        %949 = vmatprep.subr.mxu0 0.0
        %950 = vmatpush1.msra.mxu0 0.0
        %951 = vmatprep.subr.mxu0 0.0
        %952 = vmatpush1.msra.mxu0 0.0
        %953 = vmatprep.subr.mxu0 0.0
        %954 = vmatpush1.msra.mxu0 0.0
        %955 = vmatprep.subr.mxu0 0.0
        %956 = vmatpush1.msra.mxu0 0.0
        %957 = vmatprep.subr.mxu0 0.0
        %958 = vmatpush1.msra.mxu0 0.0
        %959 = vmatprep.subr.mxu0 0.0
        %960 = vmatpush1.msra.mxu0 0.0
        %961 = vmatprep.subr.mxu0 0.0
        %962 = vmatpush1.msra.mxu0 0.0
        %963 = vmatprep.subr.mxu0 0.0
        %964 = vmatpush1.msra.mxu0 0.0
        %965 = vmatprep.subr.mxu0 0.0
        %966 = vmatpush1.msra.mxu0 0.0
        %967 = vmatprep.subr.mxu0 0.0
        %968 = vmatpush1.msra.mxu0 0.0
        %969 = vmatprep.subr.mxu0 0.0
        %970 = vmatpush1.msra.mxu0 0.0
        %971 = vmatprep.subr.mxu0 0.0
        %972 = vmatpush1.msra.mxu0 0.0
        %973 = vmatprep.subr.mxu0 0.0
        %974 = vmatpush1.msra.mxu0 0.0
        %975 = vmatprep.subr.mxu0 0.0
        %976 = vmatpush1.msra.mxu0 0.0
        %977 = vmatprep.subr.mxu0 0.0
        %978 = vmatpush1.msra.mxu0 0.0
        %979 = vmatprep.subr.mxu0 0.0
        %980 = vmatpush1.msra.mxu0 0.0
        %981 = vmatprep.mubr.f32.mxu0 0.0
        %982 = vmatmul.mubr.f32.gmra.mrb[0].mxu0 %v736
        %v983 = vpop.f32.mrb[0].mxu0
        %v984 = vadd.f32 %v907, %v983
        %v985 = vpop.f32.mrb[0].mxu0
        %v986 = vadd.f32 %v909, %v985
        %987 = vmatprep.mubr.f32.mxu0 0.0
        %988 = vmatmul.mubr.f32.gmra.mrb[0].mxu0 %v739
        %v989 = vpop.f32.mrb[0].mxu0
        %v990 = vadd.f32 %v913, %v989
        %v991 = vpop.f32.mrb[0].mxu0
        %v992 = vadd.f32 %v915, %v991
        %993 = vdwg.mxu0
        %v994 = vadd.f32 %v740, %v984
        %v995 = vadd.f32 %v741, %v986
        %v996 = vadd.f32 %v742, %v990
        %v997 = vadd.f32 %v743, %v992
        %998 = vst [vmem:[#allocation2] sm:$0xff] %v994
        %999 = vst [vmem:[#allocation2 + $0x8] sm:$0xff] %v995
        %1000 = vst [vmem:[#allocation2 + $0x10] sm:$0xff] %v996
        %1001 = vst [vmem:[#allocation2 + $0x18] sm:$0xff] %v997
        %p1002 = scmp.eq.s32.totalorder %s24, 1
        // Predicated region
        $region49: #{_lambda_.1} parent=31 // pred_check
          %p1003 = pneg %p1002
        $region50: #{_lambda_.1} parent=31 // pred_check_branch
          %1005 = sbr.rel (%p1003) target = $region52
        $region51: #{_lambda_.1} parent=31 // pred_region
          %v1006 = vld [vmem:[#allocation2] sm:$0xff]
          %v1007 = vld [vmem:[#allocation2 + $0x8] sm:$0xff]
          %v1008 = vld [vmem:[#allocation2 + $0x10] sm:$0xff]
          %v1009 = vld [vmem:[#allocation2 + $0x18] sm:$0xff]
          %1010 = vst [vmem:[#allocation9] sm:$0xff] %v1006
          %1011 = vst [vmem:[#allocation9 + $0x8] sm:$0xff] %v1007
          %1012 = vst [vmem:[#allocation9 + $0x10] sm:$0xff] %v1008
          %1013 = vst [vmem:[#allocation9 + $0x18] sm:$0xff] %v1009
        $region52: #{_lambda_.1} parent=31 // pred_fallthru
          _
        // Predicated region
        $region53: #{_lambda_.1} parent=31 // pred_check
          %p1014 = pneg %p127
        $region54: #{_lambda_.1} parent=31 // pred_check_branch
          %1016 = sbr.rel (%p1014) target = $region56
        $region55: #{_lambda_.1} parent=31 // pred_region
          %s1017 = smul.u32 2, %s23
          %s1019 = ssub.s32 512, 512
          %1020 = vsyncadd [#allocation5], %s1019
          %s1021 = smul.addr %s1017, 2
          %s1022 = smul.addr %s1021, 128
          %s1023 = scalar_lea.hbm %s3, %s1022
          %s1024 = sshll.u32 [#allocation9], 4
          %s1025 = int_to_ptr.vmem [resolvable:$true] %s1024
          %1030 = dma.vmem_to_hbm [thread:$0]  %s1025, 512, %s1023, [#allocation5], 256, 256, 16
        $region56: #{_lambda_.1} parent=31 // pred_fallthru
          _
        // Predicated region
        $region57: #{_lambda_.1} parent=31 // pred_check
          %p1031 = pneg %p127
        $region58: #{_lambda_.1} parent=31 // pred_check_branch
          %1033 = sbr.rel (%p1031) target = $region60
        $region59: #{_lambda_.1} parent=31 // pred_region
          %1034 = dma.done [#allocation5], 512
        $region60: #{_lambda_.1} parent=31 // pred_fallthru
          _
      $region32: #{_lambda_.1} parent=5 // pred_fallthru
        _
      %p1035 = scmp.le.s32.totalorder 2, %s14
      // Predicated region
      $region61: #{_lambda_.1} parent=5 // pred_check
        %p1036 = pneg %p1035
      $region62: #{_lambda_.1} parent=5 // pred_check_branch
        %1038 = sbr.rel (%p1036) target = $region64
      $region63: #{_lambda_.1} parent=5 // pred_region
        %s1039 = ssub.s32 %s14, 2
      $region64: #{_lambda_.1} parent=5 // pred_fallthru
        _
    $region6: #{_lambda_.1} parent=1 // loop_footer
      %s18 = sadd.s32 1, %s14
    $region7: #{_lambda_.1} parent=1 // loop_footer_branch
      %13 = sbr.rel target = $region3
    $region8: #{_lambda_.1} parent=1 // loop_exit
      _
    %1040 = vsyncpa [#allocation4], 1
    %s1041 = scalar_lea.sflag [#allocation4], 1
    %1042 = vsyncpa %s1041, 1
    %1043 = vsyncpa [#allocation7], 1
    %s1044 = scalar_lea.sflag [#allocation7], 1
    %1045 = vsyncpa %s1044, 1
    %1046 = vsyncpa [#allocation5], 1
    %s1047 = scalar_lea.sflag [#allocation5], 1
    %1048 = vsyncpa %s1047, 1

</llo_original>
